<compile_context>
chip_gen: v5e
topology: v5e:2x2
jax: 0.10.0
libtpu: 0.0.40
codegen_flags: <defaults>
</compile_context>

<pallas_src>
import functools

import jax
import jax.numpy as jnp
from jax.experimental import pallas as pl
from jax.experimental.pallas import tpu as pltpu

LAMBDA = 2.0
SOFT_K = 40.0
NUM_CLASSES = 10   # scaled down from 1000 (resnet50 head)
HIDDEN = 32
OUT_PAD = 128      # lane-dense padded output width for the tiny head outputs


# ----------------------------------------------------------------------------
# Kernel A: fused GAP + bbox head (Linear -> ReLU -> Linear -> Sigmoid -> clamp)
#   Input is reshaped to (B, C, H*W) in the wrapper so the spatial reduction
#   runs over the lane axis.  Output is a lane-dense (1, 1, 128) padded row per
#   image; the wrapper slices the first 4 columns (cx, cy, w, h).
# ----------------------------------------------------------------------------
def _gap_bbox_kernel(x_ref, w1_ref, b1_ref, w2_ref, b2_ref, o_ref):
    feats = jnp.mean(x_ref[...], axis=-1)                       # (1, C)
    h = jnp.dot(feats, w1_ref[...], preferred_element_type=jnp.float32)
    h = jnp.maximum(h + b1_ref[...], 0.0)                       # (1, HIDDEN)
    y = jnp.dot(h, w2_ref[...], preferred_element_type=jnp.float32) + b2_ref[...]
    y = jax.nn.sigmoid(y)                                       # (1, OUT_PAD)
    # boxes[:, 2:4] = clamp(boxes[:, 2:4], 0.05, 1.0); cols >= 4 are padding.
    col = jax.lax.broadcasted_iota(jnp.int32, y.shape, 1)
    wh = (col >= 2) & (col <= 3)
    y = jnp.where(wh, jnp.clip(y, 0.05, 1.0), y)
    o_ref[...] = y[:, None, :].astype(o_ref.dtype)              # (1, 1, OUT_PAD)


def gap_bbox_head(imgs_flat, w1, b1, w2p, b2p):
    B, C, HW = imgs_flat.shape
    return pl.pallas_call(
        _gap_bbox_kernel,
        grid=(B,),
        in_specs=[
            pl.BlockSpec((1, C, HW), lambda b: (b, 0, 0)),       # one image slab
            pl.BlockSpec(w1.shape, lambda b: (0, 0)),            # weights resident
            pl.BlockSpec(b1.shape, lambda b: (0, 0)),
            pl.BlockSpec(w2p.shape, lambda b: (0, 0)),
            pl.BlockSpec(b2p.shape, lambda b: (0, 0)),
        ],
        out_specs=pl.BlockSpec((1, 1, OUT_PAD), lambda b: (b, 0, 0)),
        out_shape=jax.ShapeDtypeStruct((B, 1, OUT_PAD), jnp.float32),
        compiler_params=pltpu.CompilerParams(dimension_semantics=("parallel",)),
    )(imgs_flat, w1, b1, w2p, b2p)


# ----------------------------------------------------------------------------
# Kernel B: fused separable soft-box-mask + masked GAP + cls head.
#   boxes live in SMEM as a flat (B*4,) vector (scalar reads); one image per
#   grid step.  x_mask never hits HBM: sum(img * mask) is reduced in-register.
#   NOTE: at large images (e.g. 224x224 on v7x's 64 MiB VMEM) tile H with an
#   "arbitrary" grid axis; at these shapes a whole image per step fits easily.
# ----------------------------------------------------------------------------
def _mask_gap_cls_kernel(boxes_ref, img_ref, w1_ref, b1_ref, w2_ref, b2_ref,
                         o_ref, *, k, inv_w, inv_h, inv_hw):
    b = pl.program_id(0)
    base = b * 4
    cx = boxes_ref[base + 0]
    cy = boxes_ref[base + 1]
    bw = boxes_ref[base + 2]
    bh = boxes_ref[base + 3]

    x_l = jnp.clip(cx - bw * 0.5, 0.0, 1.0)
    x_r = jnp.clip(cx + bw * 0.5, 0.0, 1.0)
    y_t = jnp.clip(cy - bh * 0.5, 0.0, 1.0)
    y_b = jnp.clip(cy + bh * 0.5, 0.0, 1.0)

    _, C, H, W = img_ref.shape
    # torch.linspace(0, 1, N) -> i / (N - 1); separable mask: 2*(H+W) sigmoids.
    xs = jax.lax.broadcasted_iota(jnp.float32, (1, W), 1) * inv_w   # (1, W)
    ys = jax.lax.broadcasted_iota(jnp.float32, (H, 1), 0) * inv_h   # (H, 1)
    fx = jax.nn.sigmoid(k * (xs - x_l)) * jax.nn.sigmoid(k * (x_r - xs))
    fy = jax.nn.sigmoid(k * (ys - y_t)) * jax.nn.sigmoid(k * (y_b - ys))
    mask = fy * fx                                                  # (H, W)

    masked = img_ref[...] * mask[None, None, :, :]                  # (1, C, H, W)
    feats = jnp.sum(masked, axis=(2, 3)) * inv_hw                   # (1, C) masked GAP

    h = jnp.dot(feats, w1_ref[...], preferred_element_type=jnp.float32)
    h = jnp.maximum(h + b1_ref[...], 0.0)                           # (1, HIDDEN)
    logits = jnp.dot(h, w2_ref[...], preferred_element_type=jnp.float32) + b2_ref[...]
    o_ref[...] = logits[:, None, :].astype(o_ref.dtype)             # (1, 1, OUT_PAD)


def mask_gap_cls_head(boxes_flat, imgs, w1, b1, w2p, b2p, k=SOFT_K):
    B, C, H, W = imgs.shape
    # torch.linspace(0, 1, 1) == [0]: guard the degenerate H==1 / W==1 case.
    inv_w = 1.0 / (W - 1) if W > 1 else 0.0
    inv_h = 1.0 / (H - 1) if H > 1 else 0.0
    kern = functools.partial(
        _mask_gap_cls_kernel,
        k=float(k), inv_w=float(inv_w), inv_h=float(inv_h),
        inv_hw=1.0 / float(H * W))
    return pl.pallas_call(
        kern,
        grid=(B,),
        in_specs=[
            pl.BlockSpec(memory_space=pltpu.MemorySpace.SMEM),       # boxes (B*4,)
            pl.BlockSpec((1, C, H, W), lambda b: (b, 0, 0, 0)),      # one image
            pl.BlockSpec(w1.shape, lambda b: (0, 0)),
            pl.BlockSpec(b1.shape, lambda b: (0, 0)),
            pl.BlockSpec(w2p.shape, lambda b: (0, 0)),
            pl.BlockSpec(b2p.shape, lambda b: (0, 0)),
        ],
        out_specs=pl.BlockSpec((1, 1, OUT_PAD), lambda b: (b, 0, 0)),
        out_shape=jax.ShapeDtypeStruct((B, 1, OUT_PAD), jnp.float32),
        compiler_params=pltpu.CompilerParams(dimension_semantics=("parallel",)),
    )(boxes_flat, imgs, w1, b1, w2p, b2p)


# ----------------------------------------------------------------------------
# Parameter init + forward
# ----------------------------------------------------------------------------
def init_params(key, in_channels):
    ks = jax.random.split(key, 8)
    scale = 0.1

    def lin(kw, kb, din, dout, pad_to=None):
        w = scale * jax.random.normal(kw, (din, dout), jnp.float32)
        b = scale * jax.random.normal(kb, (1, dout), jnp.float32)
        if pad_to is not None and pad_to > dout:
            # Zero-pad the output dimension so kernel stores are lane-dense
            # (128-wide); padded columns are sliced off in the wrapper.
            w = jnp.pad(w, ((0, 0), (0, pad_to - dout)))
            b = jnp.pad(b, ((0, 0), (0, pad_to - dout)))
        return w, b

    bw1, bb1 = lin(ks[0], ks[1], in_channels, HIDDEN)
    bw2, bb2 = lin(ks[2], ks[3], HIDDEN, 4, pad_to=OUT_PAD)
    cw1, cb1 = lin(ks[4], ks[5], in_channels, HIDDEN)
    cw2, cb2 = lin(ks[6], ks[7], HIDDEN, NUM_CLASSES, pad_to=OUT_PAD)
    return {"bbox": (bw1, bb1, bw2, bb2), "cls": (cw1, cb1, cw2, cb2)}


def box_class_net_forward(params, imgs, targets=None, lam=LAMBDA):
    B, C, H, W = imgs.shape

    # bbox head: backbone (GAP stand-in) -> Linear -> ReLU -> Linear -> Sigmoid
    # with the w/h clamp fused into the kernel.  Spatial dims flattened so the
    # GAP reduction runs along the lane axis.
    imgs_flat = imgs.reshape(B, C, H * W)
    boxes_pad = gap_bbox_head(imgs_flat, *params["bbox"])          # (B, 1, 128)
    boxes = boxes_pad[:, 0, :4]                                    # (B, 4)

    # soft mask + masked GAP + cls head, fused (x_mask never materialized).
    logits_pad = mask_gap_cls_head(boxes.reshape(-1), imgs, *params["cls"])
    logits = logits_pad[:, 0, :NUM_CLASSES]                        # (B, NUM_CLASSES)

    if targets is None:
        return logits, boxes

    logp = jax.nn.log_softmax(logits, axis=-1)
    ce = -jnp.mean(jnp.take_along_axis(logp, targets[:, None], axis=1))
    area = jnp.mean(boxes[:, 2] * boxes[:, 3])
    loss = ce + lam * area
    return loss, logits, boxes


if __name__ == "__main__":
    key = jax.random.PRNGKey(0)
    k_img, k_par = jax.random.split(key)

    B, C, H, W = 2, 3, 16, 16
    imgs = jax.random.uniform(k_img, (B, C, H, W), jnp.float32)
    params = init_params(k_par, C)

    logits, boxes = box_class_net_forward(params, imgs)
    jax.block_until_ready((logits, boxes))

    assert logits.shape == (B, NUM_CLASSES)
    assert boxes.shape == (B, 4)
    assert bool(jnp.all(jnp.isfinite(logits)))
    assert bool(jnp.all((boxes >= 0.0) & (boxes <= 1.0)))
    print("KERNEL_OK")
</pallas_src>

<mosaic_0001>
module attributes {stable_mosaic.version = 11 : i64} {
  func.func @_gap_bbox_kernel(%arg0: i32, %arg1: memref<1x3x256xf32, #tpu.memory_space<vmem>>, %arg2: memref<3x32xf32, #tpu.memory_space<vmem>>, %arg3: memref<1x32xf32, #tpu.memory_space<vmem>>, %arg4: memref<32x128xf32, #tpu.memory_space<vmem>>, %arg5: memref<1x128xf32, #tpu.memory_space<vmem>>, %arg6: memref<1x1x128xf32, #tpu.memory_space<vmem>>) attributes {dimension_semantics = [#tpu.dimension_semantics<parallel>], iteration_bounds = array<i64: 2>, scalar_prefetch = 0 : i64, scratch_operands = 0 : i64, tpu.core_type = #tpu.core_type<tc>, window_params = [{transform_indices = @transform_0, window_bounds = array<i64: 1, 3, 256>}, {pipeline_mode = #tpu.pipeline_mode<synchronous>, transform_indices = @transform_1, window_bounds = array<i64: 3, 32>}, {pipeline_mode = #tpu.pipeline_mode<synchronous>, transform_indices = @transform_2, window_bounds = array<i64: 1, 32>}, {pipeline_mode = #tpu.pipeline_mode<synchronous>, transform_indices = @transform_3, window_bounds = array<i64: 32, 128>}, {pipeline_mode = #tpu.pipeline_mode<synchronous>, transform_indices = @transform_4, window_bounds = array<i64: 1, 128>}, {transform_indices = @transform_5, window_bounds = array<i64: 1, 1, 128>}]} {
    %c0 = arith.constant 0 : index
    %c0_0 = arith.constant 0 : index
    %c0_1 = arith.constant 0 : index
    %0 = vector.load %arg1[%c0, %c0_0, %c0_1] : memref<1x3x256xf32, #tpu.memory_space<vmem>>, vector<1x3x256xf32>
    %cst = arith.constant dense<0.000000e+00> : vector<1x3xf32>
    %1 = vector.multi_reduction <add>, %0, %cst [2] : vector<1x3x256xf32> to vector<1x3xf32>
    %cst_2 = arith.constant 2.560000e+02 : f32
    %2 = vector.broadcast %cst_2 : f32 to vector<1x3xf32>
    %3 = arith.divf %1, %2 : vector<1x3xf32>
    %c0_3 = arith.constant 0 : index
    %c0_4 = arith.constant 0 : index
    %4 = vector.load %arg2[%c0_3, %c0_4] : memref<3x32xf32, #tpu.memory_space<vmem>>, vector<3x32xf32>
    %cst_5 = arith.constant dense<0.000000e+00> : vector<1x32xf32>
    %5 = tpu.matmul %3, %4, %cst_5 {dimension_numbers = #tpu.dot_dimension_numbers<[1], [0], [0], [1], [0, 0, 1, 1], [], []>} : vector<1x3xf32>, vector<3x32xf32>, vector<1x32xf32> -> vector<1x32xf32>
    %c0_6 = arith.constant 0 : index
    %c0_7 = arith.constant 0 : index
    %6 = vector.load %arg3[%c0_6, %c0_7] : memref<1x32xf32, #tpu.memory_space<vmem>>, vector<1x32xf32>
    %7 = arith.addf %5, %6 : vector<1x32xf32>
    %cst_8 = arith.constant 0.000000e+00 : f32
    %8 = vector.broadcast %cst_8 : f32 to vector<1x32xf32>
    %9 = arith.maximumf %7, %8 : vector<1x32xf32>
    %c0_9 = arith.constant 0 : index
    %c0_10 = arith.constant 0 : index
    %10 = vector.load %arg4[%c0_9, %c0_10] : memref<32x128xf32, #tpu.memory_space<vmem>>, vector<32x128xf32>
    %cst_11 = arith.constant dense<0.000000e+00> : vector<1x128xf32>
    %11 = tpu.matmul %9, %10, %cst_11 {dimension_numbers = #tpu.dot_dimension_numbers<[1], [0], [0], [1], [0, 0, 1, 1], [], []>} : vector<1x32xf32>, vector<32x128xf32>, vector<1x128xf32> -> vector<1x128xf32>
    %c0_12 = arith.constant 0 : index
    %c0_13 = arith.constant 0 : index
    %12 = vector.load %arg5[%c0_12, %c0_13] : memref<1x128xf32, #tpu.memory_space<vmem>>, vector<1x128xf32>
    %13 = arith.addf %11, %12 : vector<1x128xf32>
    %14 = arith.negf %13 : vector<1x128xf32>
    %15 = math.exp %14 : vector<1x128xf32>
    %cst_14 = arith.constant 1.000000e+00 : f32
    %16 = vector.broadcast %cst_14 : f32 to vector<1x128xf32>
    %17 = arith.addf %16, %15 : vector<1x128xf32>
    %18 = arith.divf %16, %17 : vector<1x128xf32>
    %19 = tpu.iota {dimensions = array<i32: 1>} : vector<1x128xi32>
    %c2_i32 = arith.constant 2 : i32
    %20 = vector.broadcast %c2_i32 : i32 to vector<1x128xi32>
    %21 = arith.cmpi sge, %19, %20 : vector<1x128xi32>
    %c3_i32 = arith.constant 3 : i32
    %22 = vector.broadcast %c3_i32 : i32 to vector<1x128xi32>
    %23 = arith.cmpi sle, %19, %22 : vector<1x128xi32>
    %24 = arith.andi %21, %23 : vector<1x128xi1>
    %cst_15 = arith.constant 5.000000e-02 : f32
    %cst_16 = arith.constant 1.000000e+00 : f32
    %25 = vector.broadcast %cst_15 : f32 to vector<1x128xf32>
    %26 = arith.maximumf %25, %18 : vector<1x128xf32>
    %27 = vector.broadcast %cst_16 : f32 to vector<1x128xf32>
    %28 = arith.minimumf %27, %26 : vector<1x128xf32>
    %29 = arith.select %24, %28, %18 : vector<1x128xi1>, vector<1x128xf32>
    %30 = vector.shape_cast %29 : vector<1x128xf32> to vector<1x1x128xf32>
    %c0_17 = arith.constant 0 : index
    %c0_18 = arith.constant 0 : index
    %c0_19 = arith.constant 0 : index
    %31 = vector.load %arg6[%c0_17, %c0_18, %c0_19] : memref<1x1x128xf32, #tpu.memory_space<vmem>>, vector<1x1x128xf32>
    tpu.vector_store %arg6[%c0_17, %c0_18, %c0_19], %30 {strides = array<i32>} : memref<1x1x128xf32, #tpu.memory_space<vmem>>, vector<1x1x128xf32>,
    return
  }
  func.func @transform_0(%arg0: i32) -> (i32, i32, i32) {
    %c0_i32 = arith.constant 0 : i32
    %c0_i32_0 = arith.constant 0 : i32
    %c0_i32_1 = arith.constant 0 : i32
    return %arg0, %c0_i32, %c0_i32_0 : i32, i32, i32
  }
  func.func @transform_1(%arg0: i32) -> (i32, i32) {
    %c0_i32 = arith.constant 0 : i32
    %c0_i32_0 = arith.constant 0 : i32
    %c0_i32_1 = arith.constant 0 : i32
    return %c0_i32, %c0_i32_0 : i32, i32
  }
  func.func @transform_2(%arg0: i32) -> (i32, i32) {
    %c0_i32 = arith.constant 0 : i32
    %c0_i32_0 = arith.constant 0 : i32
    %c0_i32_1 = arith.constant 0 : i32
    return %c0_i32, %c0_i32_0 : i32, i32
  }
  func.func @transform_3(%arg0: i32) -> (i32, i32) {
    %c0_i32 = arith.constant 0 : i32
    %c0_i32_0 = arith.constant 0 : i32
    %c0_i32_1 = arith.constant 0 : i32
    return %c0_i32, %c0_i32_0 : i32, i32
  }
  func.func @transform_4(%arg0: i32) -> (i32, i32) {
    %c0_i32 = arith.constant 0 : i32
    %c0_i32_0 = arith.constant 0 : i32
    %c0_i32_1 = arith.constant 0 : i32
    return %c0_i32, %c0_i32_0 : i32, i32
  }
  func.func @transform_5(%arg0: i32) -> (i32, i32, i32) {
    %c0_i32 = arith.constant 0 : i32
    %c0_i32_0 = arith.constant 0 : i32
    %c0_i32_1 = arith.constant 0 : i32
    return %arg0, %c0_i32, %c0_i32_0 : i32, i32, i32
  }
}

</mosaic_0001>

<llo_original>
// kernel: tpu_custom_call.1
$region0: #{tpu_custom_call.1}
  #allocation0 [shape = 'u32[]', space=smem, size = 0x4, offset = 0x4, fixed_abs, tag = 'smem constant byte address 0x4 - core index']
  #allocation1 [shape = 'u32[72,128]{1,0:T(1,128)}', space=vmem, size = 0x9000, scoped, tag = 'internal scratch']
  %s0 = inlined_call_operand.vmem [shape: f32[2,3,256], index: 0, kind: input, shape index: {}]
  %s1 = inlined_call_operand.vmem [shape: f32[3,32], index: 1, kind: input, shape index: {}]
  %s2 = inlined_call_operand.vmem [shape: f32[1,32], index: 2, kind: input, shape index: {}]
  %s3 = inlined_call_operand.hbm [shape: f32[32,128], index: 3, kind: input, shape index: {}]
  %s4 = inlined_call_operand.vmem [shape: f32[1,128], index: 4, kind: input, shape index: {}]
  %s5 = inlined_call_operand.hbm [shape: f32[2,1,128], index: 5, kind: output, shape index: {}]
  %s6 = sld [smem:[#allocation0]]
  $region57: #{tpu_custom_call.1} parent=0
    _
  %s8 = ssub.s32 1, %s6
  %s9 = scalar_select 0, %s8, %s6
  $region1: #{tpu_custom_call.1} parent=0
    #allocation2 [shape = 'u8[16384]{0}', space=vmem, size = 0x4000, scoped, tag = 'input window, operand 3, single buffered']
    #allocation3 [shape = 's32[2]{0}', space=sflag, size = 0x8, scoped, tag = 'scoped memory for tpu_custom_call.1']
    #allocation4 [shape = 's32[2]{0}', space=sflag, size = 0x8, scoped, tag = 'scoped memory for tpu_custom_call.1']
    #allocation5 [shape = 'u8[1024]{0}', space=vmem, size = 0x400, scoped, tag = 'output window, operand 0']
    %10 = vsyncpa [#allocation3], 0
    %11 = vsyncpa [#allocation4], 0
    %s12 = scalar_lea.sflag [#allocation4], 1
    %13 = vsyncpa %s12, 0
    loop: start=0, step=1, limit=4
    $region2: #{tpu_custom_call.1} parent=1 // loop_pre_header
      _
    $region3: #{tpu_custom_call.1} parent=1 // loop_header
      %s15 = sphi 0, %s19
      %p16 = scmp.ge.s32.totalorder %s15, 4
      %s25 = sphi 0, %s27
      %s28 = sphi 0, %s25
      %s29 = sphi 0, %s28
      %s45 = sphi 0, %s29
      %s49 = sphi 0, %s49
      %s51 = sphi 0, %s49
      %s52 = sphi 0, %s51
      %s66 = sphi 0, %s52
      %s70 = sphi 0, %s70
      %s72 = sphi 0, %s70
      %s73 = sphi 0, %s72
      %s87 = sphi 0, %s73
      %s91 = sphi 0, %s91
      %s93 = sphi 0, %s91
      %s94 = sphi 0, %s93
      %s108 = sphi 0, %s94
      %s112 = sphi 0, %s112
      %s114 = sphi 0, %s112
      %s115 = sphi 0, %s114
      %s129 = sphi 0, %s115
      %s135 = sphi 0, %s137
      %s138 = sphi 0, %s135
      %s139 = sphi 0, %s138
      %s155 = sphi 0, %s139
    $region4: #{tpu_custom_call.1} parent=1 // loop_header_branch
      %18 = sbr.rel (%p16) target = $region8
    $region5: #{tpu_custom_call.1} parent=1 // loop_body
      %s20 = ssub.s32 %s15, 1
      %s21 = ssub.s32 %s15, 2
      %s22 = sadd.s32 %s15, 1
      %s23 = ssub.s32 %s15, %s22
      %p24 = scmp.eq.s32.totalorder %s23, 0
      %s26 = sadd.s32 %s25, 1
      %s27 = scalar_select %p24, %s25, %s26
      %p30 = pneg %p24
      %p31 = scmp.eq.s32.totalorder %s15, 1
      %p32 = por %p30, %p31
      %p33 = scmp.ne.s32.totalorder %s25, %s28
      %p34 = scmp.eq.s32.totalorder %s15, 0
      %p35 = por %p33, %p34
      %p36 = scmp.ne.s32.totalorder %s25, %s28
      %p37 = scmp.eq.s32.totalorder %s20, 1
      %p38 = por %p36, %p37
      %p39 = scmp.ne.s32.totalorder %s28, %s29
      %p40 = scmp.eq.s32.totalorder %s20, 0
      %p41 = por %p39, %p40
      %p42 = scmp.ne.s32.totalorder %s28, %s29
      %p43 = scmp.eq.s32.totalorder %s21, 1
      %p44 = por %p42, %p43
      %p46 = scmp.ne.s32.totalorder %s29, %s45
      %p47 = scmp.eq.s32.totalorder %s21, 0
      %p48 = por %p46, %p47
      %s50 = sadd.s32 %s49, 1
      %p53 = scmp.eq.s32.totalorder %s15, 1
      %p54 = scmp.ne.s32.totalorder %s49, %s51
      %p55 = scmp.eq.s32.totalorder %s15, 0
      %p56 = por %p54, %p55
      %p57 = scmp.ne.s32.totalorder %s49, %s51
      %p58 = scmp.eq.s32.totalorder %s20, 1
      %p59 = por %p57, %p58
      %p60 = scmp.ne.s32.totalorder %s51, %s52
      %p61 = scmp.eq.s32.totalorder %s20, 0
      %p62 = por %p60, %p61
      %p63 = scmp.ne.s32.totalorder %s51, %s52
      %p64 = scmp.eq.s32.totalorder %s21, 1
      %p65 = por %p63, %p64
      %p67 = scmp.ne.s32.totalorder %s52, %s66
      %p68 = scmp.eq.s32.totalorder %s21, 0
      %p69 = por %p67, %p68
      %s71 = sadd.s32 %s70, 1
      %p74 = scmp.eq.s32.totalorder %s15, 1
      %p75 = scmp.ne.s32.totalorder %s70, %s72
      %p76 = scmp.eq.s32.totalorder %s15, 0
      %p77 = por %p75, %p76
      %p78 = scmp.ne.s32.totalorder %s70, %s72
      %p79 = scmp.eq.s32.totalorder %s20, 1
      %p80 = por %p78, %p79
      %p81 = scmp.ne.s32.totalorder %s72, %s73
      %p82 = scmp.eq.s32.totalorder %s20, 0
      %p83 = por %p81, %p82
      %p84 = scmp.ne.s32.totalorder %s72, %s73
      %p85 = scmp.eq.s32.totalorder %s21, 1
      %p86 = por %p84, %p85
      %p88 = scmp.ne.s32.totalorder %s73, %s87
      %p89 = scmp.eq.s32.totalorder %s21, 0
      %p90 = por %p88, %p89
      %s92 = sadd.s32 %s91, 1
      %p95 = scmp.eq.s32.totalorder %s15, 1
      %p96 = scmp.ne.s32.totalorder %s91, %s93
      %p97 = scmp.eq.s32.totalorder %s15, 0
      %p98 = por %p96, %p97
      %p99 = scmp.ne.s32.totalorder %s91, %s93
      %p100 = scmp.eq.s32.totalorder %s20, 1
      %p101 = por %p99, %p100
      %p102 = scmp.ne.s32.totalorder %s93, %s94
      %p103 = scmp.eq.s32.totalorder %s20, 0
      %p104 = por %p102, %p103
      %p105 = scmp.ne.s32.totalorder %s93, %s94
      %p106 = scmp.eq.s32.totalorder %s21, 1
      %p107 = por %p105, %p106
      %p109 = scmp.ne.s32.totalorder %s94, %s108
      %p110 = scmp.eq.s32.totalorder %s21, 0
      %p111 = por %p109, %p110
      %s113 = sadd.s32 %s112, 1
      %p116 = scmp.eq.s32.totalorder %s15, 1
      %p117 = scmp.ne.s32.totalorder %s112, %s114
      %p118 = scmp.eq.s32.totalorder %s15, 0
      %p119 = por %p117, %p118
      %p120 = scmp.ne.s32.totalorder %s112, %s114
      %p121 = scmp.eq.s32.totalorder %s20, 1
      %p122 = por %p120, %p121
      %p123 = scmp.ne.s32.totalorder %s114, %s115
      %p124 = scmp.eq.s32.totalorder %s20, 0
      %p125 = por %p123, %p124
      %p126 = scmp.ne.s32.totalorder %s114, %s115
      %p127 = scmp.eq.s32.totalorder %s21, 1
      %p128 = por %p126, %p127
      %p130 = scmp.ne.s32.totalorder %s115, %s129
      %p131 = scmp.eq.s32.totalorder %s21, 0
      %p132 = por %p130, %p131
      %s133 = ssub.s32 %s15, %s22
      %p134 = scmp.eq.s32.totalorder %s133, 0
      %s136 = sadd.s32 %s135, 1
      %s137 = scalar_select %p134, %s135, %s136
      %p140 = pneg %p134
      %p141 = scmp.eq.s32.totalorder %s15, 1
      %p142 = por %p140, %p141
      %p143 = scmp.ne.s32.totalorder %s135, %s138
      %p144 = scmp.eq.s32.totalorder %s15, 0
      %p145 = por %p143, %p144
      %p146 = scmp.ne.s32.totalorder %s135, %s138
      %p147 = scmp.eq.s32.totalorder %s20, 1
      %p148 = por %p146, %p147
      %p149 = scmp.ne.s32.totalorder %s138, %s139
      %p150 = scmp.eq.s32.totalorder %s20, 0
      %p151 = por %p149, %p150
      %p152 = scmp.ne.s32.totalorder %s138, %s139
      %p153 = scmp.eq.s32.totalorder %s21, 1
      %p154 = por %p152, %p153
      %p156 = scmp.ne.s32.totalorder %s139, %s155
      %p157 = scmp.eq.s32.totalorder %s21, 0
      %p158 = por %p156, %p157
      %p159 = scmp.le.s32.totalorder 1, %s15
      %p160 = scmp.lt.s32.totalorder %s15, 3
      %p161 = pnand %p159, %p160
      %p162 = pneg %p161
      // Predicated region
      $region9: #{tpu_custom_call.1} parent=5 // pred_check
        _
      $region10: #{tpu_custom_call.1} parent=5 // pred_check_branch
        %164 = sbr.rel (%p161) target = $region12
      $region11: #{tpu_custom_call.1} parent=5 // pred_region
        %s165 = ssub.s32 %s15, 1
        // Predicated region
        $region13: #{tpu_custom_call.1} parent=11 // pred_check
          %p166 = pneg %p62
        $region14: #{tpu_custom_call.1} parent=11 // pred_check_branch
          %168 = sbr.rel (%p166) target = $region16
        $region15: #{tpu_custom_call.1} parent=11 // pred_region
          _
        $region16: #{tpu_custom_call.1} parent=11 // pred_fallthru
          _
        // Predicated region
        $region17: #{tpu_custom_call.1} parent=11 // pred_check
          %p169 = pneg %p83
        $region18: #{tpu_custom_call.1} parent=11 // pred_check_branch
          %171 = sbr.rel (%p169) target = $region20
        $region19: #{tpu_custom_call.1} parent=11 // pred_region
          _
        $region20: #{tpu_custom_call.1} parent=11 // pred_fallthru
          _
        // Predicated region
        $region21: #{tpu_custom_call.1} parent=11 // pred_check
          %p172 = pneg %p104
        $region22: #{tpu_custom_call.1} parent=11 // pred_check_branch
          %174 = sbr.rel (%p172) target = $region24
        $region23: #{tpu_custom_call.1} parent=11 // pred_region
          %176 = vsyncadd [#allocation3], 0
          %s177 = sshll.u32 %s3, 4
          %s178 = int_to_ptr.hbm [resolvable:$true] %s177
          %s179 = sshll.u32 [#allocation2], 4
          %s180 = int_to_ptr.vmem [resolvable:$true] %s179
          %185 = dma.hbm_to_vmem [thread:$0]  %s178, 512, %s180, [#allocation3], 128, 128, 8
        $region24: #{tpu_custom_call.1} parent=11 // pred_fallthru
          _
        // Predicated region
        $region25: #{tpu_custom_call.1} parent=11 // pred_check
          %p186 = pneg %p125
        $region26: #{tpu_custom_call.1} parent=11 // pred_check_branch
          %188 = sbr.rel (%p186) target = $region28
        $region27: #{tpu_custom_call.1} parent=11 // pred_region
          _
        $region28: #{tpu_custom_call.1} parent=11 // pred_fallthru
          _
      $region12: #{tpu_custom_call.1} parent=5 // pred_fallthru
        _
      %p189 = scmp.lt.s32.totalorder %s15, 2
      // Predicated region
      $region29: #{tpu_custom_call.1} parent=5 // pred_check
        %p190 = pneg %p189
      $region30: #{tpu_custom_call.1} parent=5 // pred_check_branch
        %192 = sbr.rel (%p190) target = $region32
      $region31: #{tpu_custom_call.1} parent=5 // pred_region
        // Predicated region
        $region33: #{tpu_custom_call.1} parent=31 // pred_check
          %p193 = pneg %p35
        $region34: #{tpu_custom_call.1} parent=31 // pred_check_branch
          %195 = sbr.rel (%p193) target = $region36
        $region35: #{tpu_custom_call.1} parent=31 // pred_region
          %p196 = scmp.lt.s32.totalorder %s15, 1
          %s197 = scalar_select %p196, %s15, 1
          %s198 = smul.addr %s197, 2
          %s199 = smul.addr %s198, 4
          %s200 = scalar_lea.vmem %s0, %s199
        $region36: #{tpu_custom_call.1} parent=31 // pred_fallthru
          _
      $region32: #{tpu_custom_call.1} parent=5 // pred_fallthru
        _
      %p201 = scmp.le.s32.totalorder 1, %s15
      %p202 = scmp.lt.s32.totalorder %s15, 3
      %p203 = pnand %p201, %p202
      %p204 = pneg %p203
      // Predicated region
      $region37: #{tpu_custom_call.1} parent=5 // pred_check
        _
      $region38: #{tpu_custom_call.1} parent=5 // pred_check_branch
        %206 = sbr.rel (%p203) target = $region40
      $region39: #{tpu_custom_call.1} parent=5 // pred_region
        %s207 = ssub.s32 %s15, 1
        // Predicated region
        $region41: #{tpu_custom_call.1} parent=39 // pred_check
          %p208 = pneg %p104
        $region42: #{tpu_custom_call.1} parent=39 // pred_check_branch
          %210 = sbr.rel (%p208) target = $region44
        $region43: #{tpu_custom_call.1} parent=39 // pred_region
          %212 = dma.done [#allocation3], 512
        $region44: #{tpu_custom_call.1} parent=39 // pred_fallthru
          _
        %p213 = scmp.lt.s32.totalorder %s20, 1
        %s214 = scalar_select %p213, %s20, 1
        %s215 = smul.addr %s214, 2
        %s216 = smul.addr %s215, 4
        %s217 = scalar_lea.vmem %s0, %s216
        %p218 = pneg %p41
        %p219 = pneg %p38
        %p220 = pneg %p62
        %p221 = pneg %p59
        %p222 = pneg %p83
        %p223 = pneg %p80
        %p224 = pneg %p104
        %p225 = pneg %p101
        %p226 = pneg %p125
        %p227 = pneg %p122
        %p228 = pneg %p151
        %p229 = pneg %p148
        %s230 = sand.u32 %s138, 1
        %s231 = scalar_lea.sflag [#allocation4], %s230
        %s232 = sand.u32 %s138, 1
        %s233 = scalar_lea.vmem [#allocation5], %s232
        %p234 = scmp.lt.s32.totalorder %s20, 1
        %s235 = scalar_select %p234, %s20, 1
        %s236 = smul.addr %s235, 2
        %s237 = smul.addr %s236, 4
        %s238 = scalar_lea.vmem %s0, %s237
        %v239 = vld [vmem:[%s238] sm:$0x77]
        %241 = vst [vmem:[#allocation1] ss:$2 sm:$0xff] %v239
        %v242 = vld.sshfl [vmem:[#allocation1] sm:$0xff pattern:$0x75316420]
        %v243 = vld.sshfl [vmem:[#allocation1 + $0x8] sm:$0xff pattern:$0x75316420]
        %vm246 = vcmask 1042432
        %v247 = vsel %vm246, %v242, 0.0
        %v248 = vsel %vm246, %v243, 0.0
        %v249 = vadd.f32 %v247, %v248
        %250 = vadd.xlane.f32.xlu0 %v249
        %v251 = vpop.xlane.xlu0 %250
        %v252 = vrcp.pop 256.0
        %v253 = vmul.f32 256.0, %v252
        %v254 = vsub.f32 1.0, %v253
        %v255 = vmul.f32 %v252, %v254
        %v256 = vadd.f32 %v252, %v255
        %vm257 = vweird.f32 %v252
        %v258 = vsel %vm257, %v252, %v256
        %v259 = vmul.f32 %v251, %v258
        %v260 = vld [vmem:[%s1] sm:$0x7]
        %v261 = vld [vmem:[%s2] sm:$0x1]
        %v263 = vlaneseq
        %v264 = vand.u32 %v263, 127
        %v265 = vperm.slane %v259, %v264
        %vm266 = vcmask 23552
        %v267 = vsel %vm266, %v265, 0
        %v270 = vsel %vm246, %v260, 0
        %272 = vmatpush.msra.mxu0 0.0
        %273 = vmatpush.msra.mxu0 0.0
        %274 = vmatpush.msra.mxu0 0.0
        %275 = vmatpush.msra.mxu0 0.0
        %276 = vmatpush.msra.mxu0 0.0
        %277 = vmatpush.msra.mxu0 0.0
        %278 = vmatpush.msra.mxu0 0.0
        %279 = vmatpush.msra.mxu0 0.0
        %280 = vmatpush.msra.mxu0 0.0
        %281 = vmatpush.msra.mxu0 0.0
        %282 = vmatpush.msra.mxu0 0.0
        %283 = vmatpush.msra.mxu0 0.0
        %284 = vmatpush.msra.mxu0 0.0
        %285 = vmatpush.msra.mxu0 0.0
        %286 = vmatpush.msra.mxu0 0.0
        %287 = vmatpush.msra.mxu0 %v270
        %288 = vmatmul.f32.gmra.mxu0 %v267
        %v289 = vpop.f32.mrf.mxu0
        %v290 = vadd.f32 %v261, %v289
        %291 = vdwg.mxu0
        %v292 = vmax.f32 %v290, 0.0
        %v293 = vld [vmem:[#allocation2] sm:$0xff]
        %v294 = vld [vmem:[#allocation2 + $0x8] sm:$0xff]
        %v295 = vld [vmem:[#allocation2 + $0x10] sm:$0xff]
        %v296 = vld [vmem:[#allocation2 + $0x18] sm:$0xff]
        %v297 = vld [vmem:[%s4] sm:$0x1]
        %vm298 = vcmask 261120
        %v300 = vsel %vm298, %v292, 0
        %302 = vmatpush.msra.mxu0 0.0
        %303 = vmatpush.msra.mxu0 0.0
        %304 = vmatpush.msra.mxu0 0.0
        %305 = vmatpush.msra.mxu0 0.0
        %306 = vmatpush.msra.mxu0 0.0
        %307 = vmatpush.msra.mxu0 0.0
        %308 = vmatpush.msra.mxu0 0.0
        %309 = vmatpush.msra.mxu0 0.0
        %310 = vmatpush.msra.mxu0 0.0
        %311 = vmatpush.msra.mxu0 0.0
        %312 = vmatpush.msra.mxu0 0.0
        %313 = vmatpush.msra.mxu0 0.0
        %314 = vmatpush.msra.mxu0 %v296
        %315 = vmatpush.msra.mxu0 %v295
        %316 = vmatpush.msra.mxu0 %v294
        %317 = vmatpush.msra.mxu0 %v293
        %318 = vmatmul.f32.gmra.mxu0 %v300
        %v319 = vpop.f32.mrf.mxu0
        %v320 = vadd.f32 %v297, %v319
        %321 = vdwg.mxu0
        %v322 = vxor.u32 %v320, 2147483648
        %v323 = vmul.f32 %v322, 1.442695
        %v324 = vpow.pop %v323
        %v325 = vadd.f32 %v324, 1.0
        %v326 = vrcp.pop %v325
        %v327 = vmul.f32 %v325, %v326
        %v328 = vsub.f32 1.0, %v327
        %v329 = vmul.f32 %v326, %v328
        %v330 = vadd.f32 %v326, %v329
        %vm331 = vweird.f32 %v325
        %vm332 = vweird.f32 %v326
        %vm333 = vmor %vm331, %vm332
        %v334 = vsel %vm333, %v326, %v330
        %v335 = vand.u32 2147483647, %v325
        %vm336 = vcmp.eq.f32.partialorder %v335, 8.507059e+37
        %v337 = vand.u32 %v325, 2147483648
        %v338 = vor.u32 1.1754944e-38, %v337
        %v339 = vsel %vm336, %v338, %v334
        %v340 = vmul.f32 1.0, %v339
        %vm341 = vcmp.ge.s32.totalorder %v264, 2
        %vm342 = vcmp.le.s32.totalorder %v264, 3
        %vm343 = vmand %vm341, %vm342
        %v344 = vmax.f32 %v340, 0.05
        %v345 = vmin.f32 %v344, 1.0
        %v346 = vsel %vm343, %v345, %v340
        %347 = vst [vmem:[%s233] sm:$0x1] %v346
        %s348 = sand.u32 %s138, 1
        %s349 = scalar_lea.sflag [#allocation4], %s348
        %s350 = sand.u32 %s138, 1
        %s351 = scalar_lea.vmem [#allocation5], %s350
        // Predicated region
        $region45: #{tpu_custom_call.1} parent=39 // pred_check
          %p352 = pneg %p148
        $region46: #{tpu_custom_call.1} parent=39 // pred_check_branch
          %354 = sbr.rel (%p352) target = $region48
        $region47: #{tpu_custom_call.1} parent=39 // pred_region
          %356 = vsyncadd %s349, 0
          %s357 = scalar_lea.hbm %s5, %s20
          %s359 = sshll.u32 %s351, 4
          %s360 = int_to_ptr.vmem [resolvable:$true] %s359
          %s361 = sshll.u32 %s357, 4
          %s362 = int_to_ptr.hbm [resolvable:$true] %s361
          %364 = dma.vmem_to_hbm [thread:$0]  %s360, 16, %s362, %s349
        $region48: #{tpu_custom_call.1} parent=39 // pred_fallthru
          _
      $region40: #{tpu_custom_call.1} parent=5 // pred_fallthru
        _
      %p365 = scmp.le.s32.totalorder 2, %s15
      // Predicated region
      $region49: #{tpu_custom_call.1} parent=5 // pred_check
        %p366 = pneg %p365
      $region50: #{tpu_custom_call.1} parent=5 // pred_check_branch
        %368 = sbr.rel (%p366) target = $region52
      $region51: #{tpu_custom_call.1} parent=5 // pred_region
        %s369 = ssub.s32 %s15, 2
        // Predicated region
        $region53: #{tpu_custom_call.1} parent=51 // pred_check
          %p370 = pneg %p154
        $region54: #{tpu_custom_call.1} parent=51 // pred_check_branch
          %372 = sbr.rel (%p370) target = $region56
        $region55: #{tpu_custom_call.1} parent=51 // pred_region
          %s373 = sand.u32 %s139, 1
          %s374 = scalar_lea.sflag [#allocation4], %s373
          %s375 = sand.u32 %s139, 1
          %s376 = scalar_lea.vmem [#allocation5], %s375
          %378 = dma.done %s374, 16
        $region56: #{tpu_custom_call.1} parent=51 // pred_fallthru
          _
      $region52: #{tpu_custom_call.1} parent=5 // pred_fallthru
        _
    $region6: #{tpu_custom_call.1} parent=1 // loop_footer
      %s19 = sadd.s32 1, %s15
    $region7: #{tpu_custom_call.1} parent=1 // loop_footer_branch
      %14 = sbr.rel target = $region3
    $region8: #{tpu_custom_call.1} parent=1 // loop_exit
      _
    %379 = vsyncpa [#allocation3], 1
    %s380 = scalar_lea.sflag [#allocation3], 1
    %381 = vsyncpa %s380, 1
    %382 = vsyncpa [#allocation4], 1
    %s383 = scalar_lea.sflag [#allocation4], 1
    %384 = vsyncpa %s383, 1

</llo_original>
